<compile_context>
chip_gen: v7x
topology: tpu7x:2x2x1
jax: 0.10.0
libtpu: 0.0.40
codegen_flags: <defaults>
</compile_context>

<pallas_src>
import functools

import jax
import jax.numpy as jnp
from jax import lax
from jax.experimental import pallas as pl
from jax.experimental.pallas import tpu as pltpu


def _make_kernel(E: int, e_pad: int, S: int, ts: int, mask_seq: bool):
    inv_s = 1.0 / float(S)
    # Row (within the last S tile) holding the true last token x[:, -1, :].
    last_in_tile = (S - 1) - ((pl.cdiv(S, ts) - 1) * ts)

    def kernel(x_ref, wt_ref, o_ref, max_sc, sum_sc, comb_sc):
        # x_ref:   [TB, TS, E]   current (batch-tile, seq-tile) block (native dtype)
        # wt_ref:  [3Ep, E]      transposed, K-padded Linear weight (resident)
        # o_ref:   [TB, E]       output block (same block across the S axis)
        # max_sc / sum_sc: [TB, E] f32 running reductions
        # comb_sc: [TB, 3Ep]     staging buffer for the single fused matmul
        s = pl.program_id(1)

        @pl.when(s == 0)
        def _init():
            max_sc[...] = jnp.full_like(max_sc, -jnp.inf)
            sum_sc[...] = jnp.zeros_like(sum_sc)

        x = x_ref[...]                                    # native dtype
        if mask_seq:
            # Only the last S tile is ragged; the compare/select is cheap VPU
            # filler in an HBM-bound kernel.
            row = lax.broadcasted_iota(jnp.int32, (1, ts, 1), 1)
            valid = row < (S - s * ts)
            x_max = jnp.where(valid, x, jnp.asarray(-jnp.inf, x.dtype))
            x_sum = jnp.where(valid, x, jnp.asarray(0, x.dtype))
        else:
            x_max = x
            x_sum = x

        max_sc[...] = jnp.maximum(max_sc[...],
                                  jnp.max(x_max, axis=1).astype(jnp.float32))
        sum_sc[...] = sum_sc[...] + jnp.sum(x_sum, axis=1, dtype=jnp.float32)

        @pl.when(s == pl.num_programs(1) - 1)
        def _finalize():
            cdt = comb_sc.dtype
            if e_pad != E:
                comb_sc[...] = jnp.zeros_like(comb_sc)    # zero the padded lanes
            # "concat" = three static-slice stores into the staging buffer.
            comb_sc[:, 0:E] = max_sc[...].astype(cdt)
            comb_sc[:, e_pad:e_pad + E] = (sum_sc[...] * inv_s).astype(cdt)
            comb_sc[:, 2 * e_pad:2 * e_pad + E] = (
                x_ref[:, last_in_tile, :].astype(cdt))
            y = jnp.dot(comb_sc[...], wt_ref[...],
                        preferred_element_type=jnp.float32)
            o_ref[...] = y.astype(o_ref.dtype)

    return kernel


def _vmem_capacity_bytes() -> int:
    try:
        info = pltpu.get_tpu_info()
        cap = getattr(info, "vmem_capacity_bytes", None)
        if cap:
            return int(cap)
    except Exception:
        pass
    return 64 * 1024 * 1024          # conservative default: v7x per-TC VMEM


def _pick_batch_tile(B: int) -> int:
    if B < 16:
        return B                     # too small to be worth splitting
    # Keep >= 2 steps on the (parallel) batch axis so both v7x TCs get work.
    cap = min(128, B // 2)
    for tb in range(cap - cap % 8, 7, -8):
        if B % tb == 0:
            return tb
    return B


def _pick_seq_tile(S: int, per_buffer_budget: int, row_bytes: int) -> int:
    cap = max(8, per_buffer_budget // max(1, row_bytes))
    if cap >= S:
        return S
    cap = max(8, (cap // 8) * 8)
    for ts in range(cap, 7, -8):     # prefer an aligned divisor (no masking)
        if S % ts == 0:
            return ts
    return cap                       # ragged tail: kernel masks the last tile


@functools.partial(jax.jit, static_argnames=("tb", "ts"))
def prototype_embedding(x, weight, *, tb=None, ts=None):
    """x: [B, S, E]; weight: [E, 3E] (PyTorch nn.Linear layout, bias=False)."""
    B, S, E = x.shape
    assert weight.shape == (E, 3 * E)

    # Lane-align only the matmul K dimension: W^T rows are zero-padded to e_pad
    # per pooled feature.  x itself streams unpadded (no extra HBM pass).
    e_pad = ((E + 127) // 128) * 128
    w_t = jnp.transpose(weight)                              # [3E, E]
    if e_pad != E:
        w_tp = jnp.zeros((3 * e_pad, E), dtype=weight.dtype)
        for c in range(3):
            w_tp = w_tp.at[c * e_pad:c * e_pad + E, :].set(
                w_t[c * E:(c + 1) * E, :])
        w_t = w_tp

    comb_dtype = jnp.promote_types(x.dtype, weight.dtype)

    if tb is None:
        tb = _pick_batch_tile(B)
    if B % tb != 0:
        raise ValueError(f"tb={tb} must divide B={B}")

    # --- VMEM budgeting (per TensorCore) ---------------------------------
    vmem_cap = _vmem_capacity_bytes()
    vmem_target = int(vmem_cap * 0.70)       # tiling budget, leave headroom
    vmem_limit = int(vmem_cap * 0.85)        # scoped-VMEM limit for Mosaic
    w_bytes = 3 * e_pad * E * jnp.dtype(weight.dtype).itemsize
    # Single-buffer the resident weight only once it claims meaningful VMEM;
    # for tiny weights default double-buffering costs nothing.
    single_buffer_w = w_bytes > (2 << 20)
    w_resident = w_bytes * (1 if single_buffer_w else 2)
    scratch_bytes = (2 * tb * E * 4
                     + tb * 3 * e_pad * jnp.dtype(comb_dtype).itemsize)
    out_bytes = 2 * tb * E * jnp.dtype(x.dtype).itemsize
    x_row_bytes = tb * E * jnp.dtype(x.dtype).itemsize
    avail = vmem_target - w_resident - scratch_bytes - out_bytes
    if avail < 2 * 8 * x_row_bytes:
        # TODO(synk): for very large hidden sizes, tile the output-E dimension
        # (third grid axis over W^T columns) or keep W^T in HBM (pl.ANY) and
        # DMA slabs at finalize instead of holding it fully resident.
        raise ValueError(
            f"hidden_size={E}: resident W^T ({w_bytes} bytes) leaves no room "
            f"for the x pipeline in VMEM ({vmem_cap} bytes)")

    if ts is None:
        ts = _pick_seq_tile(S, avail // 2, x_row_bytes)
    if not (ts == S or (ts % 8 == 0 and 8 <= ts <= S)):
        raise ValueError(f"ts={ts} must equal S or be a multiple of 8 <= S={S}")

    grid = (B // tb, pl.cdiv(S, ts))
    mask_seq = (S % ts) != 0
    kernel = _make_kernel(E, e_pad, S, ts, mask_seq)

    w_spec_kwargs = {"pipeline_mode": pl.Buffered(1)} if single_buffer_w else {}

    out = pl.pallas_call(
        kernel,
        out_shape=jax.ShapeDtypeStruct((B, E), x.dtype),
        grid_spec=pltpu.PrefetchScalarGridSpec(
            num_scalar_prefetch=0,
            grid=grid,
            in_specs=[
                pl.BlockSpec((tb, ts, E), lambda b, s: (b, s, 0)),      # x
                pl.BlockSpec((3 * e_pad, E), lambda b, s: (0, 0),       # W^T
                             **w_spec_kwargs),
            ],
            out_specs=pl.BlockSpec((tb, E), lambda b, s: (b, 0)),
            scratch_shapes=[
                pltpu.VMEM((tb, E), jnp.float32),          # running max
                pltpu.VMEM((tb, E), jnp.float32),          # running sum
                pltpu.VMEM((tb, 3 * e_pad), comb_dtype),   # fused-dot staging
            ],
        ),
        compiler_params=pltpu.CompilerParams(
            dimension_semantics=("parallel", "arbitrary"),
            vmem_limit_bytes=vmem_limit,
        ),
    )(x, w_t)
    return out


def prototype_embedding_ref(x, weight):
    max_pool = jnp.max(x, axis=1)
    avg_pool = jnp.mean(x, axis=1)
    last = x[:, -1, :]
    combined = jnp.concatenate([max_pool, avg_pool, last], axis=-1)
    return jnp.dot(combined, weight.T, precision=jax.lax.Precision.HIGHEST)


if __name__ == "__main__":
    B, S, E = 2, 16, 32  # batch, src seq len, hidden_size (toy sizes)
    key = jax.random.PRNGKey(0)
    kx, kw, kx2 = jax.random.split(key, 3)

    x = jax.random.normal(kx, (B, S, E), dtype=jnp.float32)
    # Deterministic synthetic init for nn.Linear(3*hidden, hidden, bias=False):
    # weight shape [out_features, in_features] = [E, 3E].
    bound = 1.0 / jnp.sqrt(3.0 * E)
    weight = jax.random.uniform(kw, (E, 3 * E), dtype=jnp.float32,
                                minval=-bound, maxval=bound)

    ref = prototype_embedding_ref(x, weight)

    # Tolerance absorbs MXU default-precision f32 matmul vs the HIGHEST-precision
    # reference; functional bugs (wrong pooling/slice/scale) are O(0.1+).
    TOL = dict(atol=5e-3, rtol=5e-3)

    # Default (auto-picked) tiling path: single S tile.
    out = jax.block_until_ready(prototype_embedding(x, weight))
    assert out.shape == (B, E)
    assert jnp.allclose(out, ref, **TOL), "mismatch vs reference (auto)"

    # Force a 2-step S reduction to exercise init/accumulate/finalize.
    out2 = jax.block_until_ready(prototype_embedding(x, weight, ts=8))
    assert out2.shape == (B, E)
    assert jnp.allclose(out2, ref, **TOL), "mismatch vs reference (ts=8)"

    # Ragged S (S % ts != 0) exercises the cdiv grid + in-kernel masking path.
    S2 = 12
    x2 = jax.random.normal(kx2, (B, S2, E), dtype=jnp.float32)
    ref2 = prototype_embedding_ref(x2, weight)
    out3 = jax.block_until_ready(prototype_embedding(x2, weight, ts=8))
    assert out3.shape == (B, E)
    assert jnp.allclose(out3, ref2, **TOL), "mismatch vs reference (ragged S)"

    print("KERNEL_OK")
</pallas_src>

<mosaic_0001>
module attributes {stable_mosaic.version = 11 : i64} {
  func.func @kernel(%arg0: i32, %arg1: i32, %arg2: memref<2x16x32xf32, #tpu.memory_space<vmem>>, %arg3: memref<384x32xf32, #tpu.memory_space<vmem>>, %arg4: memref<2x32xf32, #tpu.memory_space<vmem>>, %arg5: memref<2x32xf32, #tpu.memory_space<vmem>>, %arg6: memref<2x32xf32, #tpu.memory_space<vmem>>, %arg7: memref<2x384xf32, #tpu.memory_space<vmem>>) attributes {dimension_semantics = [#tpu.dimension_semantics<parallel>, #tpu.dimension_semantics<arbitrary>], iteration_bounds = array<i64: 1, 1>, scalar_prefetch = 0 : i64, scratch_operands = 3 : i64, tpu.core_type = #tpu.core_type<tc>, window_params = [{transform_indices = @transform_0, window_bounds = array<i64: 2, 16, 32>}, {pipeline_mode = #tpu.pipeline_mode<synchronous>, transform_indices = @transform_1, window_bounds = array<i64: 384, 32>}, {transform_indices = @transform_2, window_bounds = array<i64: 2, 32>}]} {
    %c0_i32 = arith.constant 0 : i32
    %0 = arith.cmpi eq, %arg1, %c0_i32 : i32
    %1 = arith.extui %0 : i1 to i32
    %c0_i32_0 = arith.constant 0 : i32
    %2 = arith.cmpi ne, %1, %c0_i32_0 : i32
    scf.if %2 {
      %cst_14 = arith.constant 0xFF800000 : f32
      %15 = vector.broadcast %cst_14 : f32 to vector<2x32xf32>
      %c0_15 = arith.constant 0 : index
      %c0_16 = arith.constant 0 : index
      %16 = vector.load %arg5[%c0_15, %c0_16] : memref<2x32xf32, #tpu.memory_space<vmem>>, vector<2x32xf32>
      tpu.vector_store %arg5[%c0_15, %c0_16], %15 {strides = array<i32>} : memref<2x32xf32, #tpu.memory_space<vmem>>, vector<2x32xf32>,
      %cst_17 = arith.constant 0.000000e+00 : f32
      %17 = vector.broadcast %cst_17 : f32 to vector<2x32xf32>
      %c0_18 = arith.constant 0 : index
      %c0_19 = arith.constant 0 : index
      %18 = vector.load %arg6[%c0_18, %c0_19] : memref<2x32xf32, #tpu.memory_space<vmem>>, vector<2x32xf32>
      tpu.vector_store %arg6[%c0_18, %c0_19], %17 {strides = array<i32>} : memref<2x32xf32, #tpu.memory_space<vmem>>, vector<2x32xf32>,
    } else {
    }
    %c0 = arith.constant 0 : index
    %c0_1 = arith.constant 0 : index
    %c0_2 = arith.constant 0 : index
    %3 = vector.load %arg2[%c0, %c0_1, %c0_2] : memref<2x16x32xf32, #tpu.memory_space<vmem>>, vector<2x16x32xf32>
    %c0_3 = arith.constant 0 : index
    %c0_4 = arith.constant 0 : index
    %4 = vector.load %arg5[%c0_3, %c0_4] : memref<2x32xf32, #tpu.memory_space<vmem>>, vector<2x32xf32>
    %cst = arith.constant dense<0xFF800000> : vector<2x32xf32>
    %5 = vector.multi_reduction <maximumf>, %3, %cst [1] : vector<2x16x32xf32> to vector<2x32xf32>
    %6 = arith.maximumf %4, %5 : vector<2x32xf32>
    %c0_5 = arith.constant 0 : index
    %c0_6 = arith.constant 0 : index
    %7 = vector.load %arg5[%c0_5, %c0_6] : memref<2x32xf32, #tpu.memory_space<vmem>>, vector<2x32xf32>
    tpu.vector_store %arg5[%c0_5, %c0_6], %6 {strides = array<i32>} : memref<2x32xf32, #tpu.memory_space<vmem>>, vector<2x32xf32>,
    %c0_7 = arith.constant 0 : index
    %c0_8 = arith.constant 0 : index
    %8 = vector.load %arg6[%c0_7, %c0_8] : memref<2x32xf32, #tpu.memory_space<vmem>>, vector<2x32xf32>
    %cst_9 = arith.constant dense<0.000000e+00> : vector<2x32xf32>
    %9 = vector.multi_reduction <add>, %3, %cst_9 [1] : vector<2x16x32xf32> to vector<2x32xf32>
    %10 = arith.addf %8, %9 : vector<2x32xf32>
    %c0_10 = arith.constant 0 : index
    %c0_11 = arith.constant 0 : index
    %11 = vector.load %arg6[%c0_10, %c0_11] : memref<2x32xf32, #tpu.memory_space<vmem>>, vector<2x32xf32>
    tpu.vector_store %arg6[%c0_10, %c0_11], %10 {strides = array<i32>} : memref<2x32xf32, #tpu.memory_space<vmem>>, vector<2x32xf32>,
    %c0_i32_12 = arith.constant 0 : i32
    %12 = arith.cmpi eq, %arg1, %c0_i32_12 : i32
    %13 = arith.extui %12 : i1 to i32
    %c0_i32_13 = arith.constant 0 : i32
    %14 = arith.cmpi ne, %13, %c0_i32_13 : i32
    scf.if %14 {
      %cst_14 = arith.constant 0.000000e+00 : f32
      %15 = vector.broadcast %cst_14 : f32 to vector<2x384xf32>
      %c0_15 = arith.constant 0 : index
      %c0_16 = arith.constant 0 : index
      %16 = vector.load %arg7[%c0_15, %c0_16] : memref<2x384xf32, #tpu.memory_space<vmem>>, vector<2x384xf32>
      tpu.vector_store %arg7[%c0_15, %c0_16], %15 {strides = array<i32>} : memref<2x384xf32, #tpu.memory_space<vmem>>, vector<2x384xf32>,
      %c0_17 = arith.constant 0 : index
      %c0_18 = arith.constant 0 : index
      %17 = vector.load %arg5[%c0_17, %c0_18] : memref<2x32xf32, #tpu.memory_space<vmem>>, vector<2x32xf32>
      %c0_19 = arith.constant 0 : index
      %c0_20 = arith.constant 0 : index
      %18 = vector.load %arg7[%c0_19, %c0_20] : memref<2x384xf32, #tpu.memory_space<vmem>>, vector<2x32xf32>
      tpu.vector_store %arg7[%c0_19, %c0_20], %17 {strides = array<i32>} : memref<2x384xf32, #tpu.memory_space<vmem>>, vector<2x32xf32>,
      %c0_21 = arith.constant 0 : index
      %c0_22 = arith.constant 0 : index
      %19 = vector.load %arg6[%c0_21, %c0_22] : memref<2x32xf32, #tpu.memory_space<vmem>>, vector<2x32xf32>
      %cst_23 = arith.constant 6.250000e-02 : f32
      %20 = vector.broadcast %cst_23 : f32 to vector<2x32xf32>
      %21 = arith.mulf %19, %20 : vector<2x32xf32>
      %c0_24 = arith.constant 0 : index
      %c128 = arith.constant 128 : index
      %22 = vector.load %arg7[%c0_24, %c128] : memref<2x384xf32, #tpu.memory_space<vmem>>, vector<2x32xf32>
      tpu.vector_store %arg7[%c0_24, %c128], %21 {strides = array<i32>} : memref<2x384xf32, #tpu.memory_space<vmem>>, vector<2x32xf32>,
      %c0_25 = arith.constant 0 : index
      %c15 = arith.constant 15 : index
      %c0_26 = arith.constant 0 : index
      %23 = vector.load %arg2[%c0_25, %c15, %c0_26] : memref<2x16x32xf32, #tpu.memory_space<vmem>>, vector<2x1x32xf32>
      %24 = vector.shape_cast %23 : vector<2x1x32xf32> to vector<2x32xf32>
      %c0_27 = arith.constant 0 : index
      %c256 = arith.constant 256 : index
      %25 = vector.load %arg7[%c0_27, %c256] : memref<2x384xf32, #tpu.memory_space<vmem>>, vector<2x32xf32>
      tpu.vector_store %arg7[%c0_27, %c256], %24 {strides = array<i32>} : memref<2x384xf32, #tpu.memory_space<vmem>>, vector<2x32xf32>,
      %c0_28 = arith.constant 0 : index
      %c0_29 = arith.constant 0 : index
      %26 = vector.load %arg7[%c0_28, %c0_29] : memref<2x384xf32, #tpu.memory_space<vmem>>, vector<2x384xf32>
      %c0_30 = arith.constant 0 : index
      %c0_31 = arith.constant 0 : index
      %27 = vector.load %arg3[%c0_30, %c0_31] : memref<384x32xf32, #tpu.memory_space<vmem>>, vector<384x32xf32>
      %cst_32 = arith.constant dense<0.000000e+00> : vector<2x32xf32>
      %28 = tpu.matmul %26, %27, %cst_32 {dimension_numbers = #tpu.dot_dimension_numbers<[1], [0], [0], [1], [0, 0, 1, 1], [], []>} : vector<2x384xf32>, vector<384x32xf32>, vector<2x32xf32> -> vector<2x32xf32>
      %c0_33 = arith.constant 0 : index
      %c0_34 = arith.constant 0 : index
      %29 = vector.load %arg4[%c0_33, %c0_34] : memref<2x32xf32, #tpu.memory_space<vmem>>, vector<2x32xf32>
      tpu.vector_store %arg4[%c0_33, %c0_34], %28 {strides = array<i32>} : memref<2x32xf32, #tpu.memory_space<vmem>>, vector<2x32xf32>,
    } else {
    }
    return
  }
  func.func @transform_0(%arg0: i32, %arg1: i32) -> (i32, i32, i32) {
    %c0_i32 = arith.constant 0 : i32
    %c0_i32_0 = arith.constant 0 : i32
    return %arg0, %arg1, %c0_i32 : i32, i32, i32
  }
  func.func @transform_1(%arg0: i32, %arg1: i32) -> (i32, i32) {
    %c0_i32 = arith.constant 0 : i32
    %c0_i32_0 = arith.constant 0 : i32
    %c0_i32_1 = arith.constant 0 : i32
    return %c0_i32, %c0_i32_0 : i32, i32
  }
  func.func @transform_2(%arg0: i32, %arg1: i32) -> (i32, i32) {
    %c0_i32 = arith.constant 0 : i32
    %c0_i32_0 = arith.constant 0 : i32
    return %arg0, %c0_i32 : i32, i32
  }
}

</mosaic_0001>

<llo_original>
// kernel: prototype_embedding.1
$region0: #{prototype_embedding.1}
  #allocation0 [shape = 'u32[]', space=smem, size = 0x4, offset = 0x4, fixed_abs, tag = 'smem constant byte address 0x4 - core index']
  #allocation1 [shape = 'u32[144,128]{1,0:T(1,128)}', space=vmem, size = 0x12000, scoped, tag = 'internal scratch']
  #allocation2 [shape = 'f32[2,32]{1,0:T(2,128)}', space=vmem, size = 0x400, scoped, tag = 'scratch operand']
  #allocation3 [shape = 'f32[2,32]{1,0:T(2,128)}', space=vmem, size = 0x400, scoped, tag = 'scratch operand']
  #allocation4 [shape = 'f32[2,384]{1,0:T(2,128)}', space=vmem, size = 0xc00, scoped, tag = 'scratch operand']
  %s0 = inlined_call_operand.vmem [shape: f32[2,16,32], index: 0, kind: input, shape index: {}]
  %s1 = inlined_call_operand.vmem [shape: f32[384,32], index: 1, kind: input, shape index: {}]
  %s2 = inlined_call_operand.hbm [shape: f32[2,32], index: 2, kind: output, shape index: {}]
  %s3 = sld [smem:[#allocation0]]
  $region26: #{prototype_embedding.1} parent=0
    _
  %s5 = ssub.s32 1, %s3
  %s6 = scalar_select 0, %s5, %s3
  $region1: #{prototype_embedding.1} parent=0
    #allocation5 [shape = 'u8[1024]{0}', space=vmem, size = 0x400, scoped, tag = 'output window, operand 0, single buffered']
    #allocation6 [shape = 's32[1]{0}', space=sflag, size = 0x4, scoped, tag = 'scoped memory for prototype_embedding.1']
    %7 = vsyncpa [#allocation6], 0
    // Predicated region
    $region2: #{prototype_embedding.1} parent=1 // pred_check
      _
    $region3: #{prototype_embedding.1} parent=1 // pred_check_branch
      %9 = sbr.rel (0) target = $region5
    $region4: #{prototype_embedding.1} parent=1 // pred_region
      _
    $region5: #{prototype_embedding.1} parent=1 // pred_fallthru
      _
    // Predicated region
    $region6: #{prototype_embedding.1} parent=1 // pred_check
      _
    $region7: #{prototype_embedding.1} parent=1 // pred_check_branch
      %11 = sbr.rel (0) target = $region9
    $region8: #{prototype_embedding.1} parent=1 // pred_region
      _
    $region9: #{prototype_embedding.1} parent=1 // pred_fallthru
      _
    %p12 = scmp.eq.s32.totalorder 0, 0
    // Predicated region
    $region10: #{prototype_embedding.1} parent=1 // pred_check
      %p13 = pneg %p12
    $region11: #{prototype_embedding.1} parent=1 // pred_check_branch
      %15 = sbr.rel (%p13) target = $region13
    $region12: #{prototype_embedding.1} parent=1 // pred_region
      %vm16 = vcmask 254976
      %17 = vst.msk [vmem:[#allocation2] sm:$0x3] %vm16, -inf
      %18 = vst.msk [vmem:[#allocation3] sm:$0x3] %vm16, 0.0
    $region13: #{prototype_embedding.1} parent=1 // pred_fallthru
      _
    %v19 = vld [vmem:[%s0] sm:$0xff]
    %v20 = vld [vmem:[%s0 + $0x8] sm:$0xff]
    %v21 = vld [vmem:[%s0 + $0x10] sm:$0xff]
    %v22 = vld [vmem:[%s0 + $0x18] sm:$0xff]
    %v23 = vld [vmem:[#allocation2] sm:$0x3]
    %vm24 = vcmask 261120
    %v25 = vsel %vm24, %v19, -inf
    %v26 = vsel %vm24, %v20, -inf
    %v27 = vmax.f32 %v25, %v26
    %v28 = vrot.slane %v27, 4
    %v29 = vmax.f32 %v27, %v28
    %v30 = vrot.slane %v29, 2
    %v31 = vmax.f32 %v29, %v30
    %v32 = vrot.slane %v31, 1
    %v33 = vmax.f32 %v31, %v32
    %v34 = vsel %vm24, %v21, -inf
    %v35 = vsel %vm24, %v22, -inf
    %v36 = vmax.f32 %v34, %v35
    %v37 = vrot.slane %v36, 4
    %v38 = vmax.f32 %v36, %v37
    %v39 = vrot.slane %v38, 2
    %v40 = vmax.f32 %v38, %v39
    %v41 = vrot.slane %v40, 1
    %v42 = vmax.f32 %v40, %v41
    %vm45 = vcmask 1041409
    %v46 = vsel %vm45, %v42, %v33
    %v48 = vmax.f32 %v23, %v46
    %vm49 = vcmask 254976
    %50 = vst.msk [vmem:[#allocation2] sm:$0x3] %vm49, %v48
    %v51 = vld [vmem:[#allocation3] sm:$0x3]
    %v52 = vsel %vm24, %v19, 0.0
    %v53 = vsel %vm24, %v20, 0.0
    %v54 = vadd.f32 %v52, %v53
    %v55 = vrot.slane %v54, 4
    %v56 = vadd.f32 %v54, %v55
    %v57 = vrot.slane %v56, 2
    %v58 = vadd.f32 %v56, %v57
    %v59 = vrot.slane %v58, 1
    %v60 = vadd.f32 %v58, %v59
    %v61 = vsel %vm24, %v21, 0.0
    %v62 = vsel %vm24, %v22, 0.0
    %v63 = vadd.f32 %v61, %v62
    %v64 = vrot.slane %v63, 4
    %v65 = vadd.f32 %v63, %v64
    %v66 = vrot.slane %v65, 2
    %v67 = vadd.f32 %v65, %v66
    %v68 = vrot.slane %v67, 1
    %v69 = vadd.f32 %v67, %v68
    %v72 = vsel %vm45, %v69, %v60
    %v74 = vadd.f32 %v51, %v72
    %75 = vst.msk [vmem:[#allocation3] sm:$0x3] %vm49, %v74
    // Predicated region
    $region14: #{prototype_embedding.1} parent=1 // pred_check
      %p76 = pneg %p12
    $region15: #{prototype_embedding.1} parent=1 // pred_check_branch
      %78 = sbr.rel (%p76) target = $region17
    $region16: #{prototype_embedding.1} parent=1 // pred_region
      %79 = vst [vmem:[#allocation4] sm:$0x3f] 0.0
      %v80 = vld [vmem:[#allocation2] sm:$0x3]
      %81 = vst.msk [vmem:[#allocation4] sm:$0x3] %vm49, %v80
      %v82 = vld [vmem:[#allocation3] sm:$0x3]
      %v83 = vmul.f32 %v82, 0.0625
      %84 = vst.msk [vmem:[#allocation4 + $0x2] sm:$0x3] %vm49, %v83
      %v85 = vld [vmem:[%s0 + $0xf] sm:$0x1]
      %v86 = vld [vmem:[%s0 + $0x1f] sm:$0x1]
      %v90 = vunpack.c.l.s4 1983009808
      %v91 = vunpack.c.0.s8 %v90
      %v92 = vlaneseq
      %v93 = vshrl.u32 %v92, 7
      %v94 = vsub.s32 %v91, %v93
      %v95 = vrot.slane %v85, %v94
      %v97 = vunpack.c.l.s4 1983009808
      %v98 = vunpack.c.0.s8 %v97
      %v99 = vlaneseq
      %v100 = vshrl.u32 %v99, 7
      %v101 = vsub.s32 %v98, %v100
      %v102 = vrot.slane %v86, %v101
      %vm103 = vcmask 1044484
      %v104 = vsel %vm103, %v95, %v95
      %vm105 = vcmask 1046534
      %v106 = vsel %vm105, %v95, %v104
      %v107 = vrot.slane %v102, 7
      %v108 = vsel %vm45, %v107, %v106
      %vm109 = vcmask 1043459
      %v110 = vsel %vm109, %v107, %v108
      %vm111 = vcmask 1045509
      %v112 = vsel %vm111, %v107, %v110
      %vm113 = vcmask 1047559
      %v114 = vsel %vm113, %v107, %v112
      %116 = vst.msk [vmem:[#allocation4 + $0x4] sm:$0x3] %vm49, %v114
      %v117 = vld [vmem:[#allocation4] sm:$0x3f]
      %v118 = vld [vmem:[%s1] sm:$0xff]
      %v119 = vld [vmem:[%s1 + $0x8] sm:$0xff]
      %v120 = vld [vmem:[%s1 + $0x10] sm:$0xff]
      %v121 = vld [vmem:[%s1 + $0x18] sm:$0xff]
      %v122 = vld [vmem:[%s1 + $0x20] sm:$0xff]
      %v123 = vld [vmem:[%s1 + $0x28] sm:$0xff]
      %v124 = vld [vmem:[%s1 + $0x30] sm:$0xff]
      %v125 = vld [vmem:[%s1 + $0x38] sm:$0xff]
      %v126 = vld [vmem:[%s1 + $0x40] sm:$0xff]
      %v127 = vld [vmem:[%s1 + $0x48] sm:$0xff]
      %v128 = vld [vmem:[%s1 + $0x50] sm:$0xff]
      %v129 = vld [vmem:[%s1 + $0x58] sm:$0xff]
      %v130 = vld [vmem:[%s1 + $0x60] sm:$0xff]
      %v131 = vld [vmem:[%s1 + $0x68] sm:$0xff]
      %v132 = vld [vmem:[%s1 + $0x70] sm:$0xff]
      %v133 = vld [vmem:[%s1 + $0x78] sm:$0xff]
      %v134 = vld [vmem:[%s1 + $0x80] sm:$0xff]
      %v135 = vld [vmem:[%s1 + $0x88] sm:$0xff]
      %v136 = vld [vmem:[%s1 + $0x90] sm:$0xff]
      %v137 = vld [vmem:[%s1 + $0x98] sm:$0xff]
      %v138 = vld [vmem:[%s1 + $0xa0] sm:$0xff]
      %v139 = vld [vmem:[%s1 + $0xa8] sm:$0xff]
      %v140 = vld [vmem:[%s1 + $0xb0] sm:$0xff]
      %v141 = vld [vmem:[%s1 + $0xb8] sm:$0xff]
      %v142 = vld [vmem:[%s1 + $0xc0] sm:$0xff]
      %v143 = vld [vmem:[%s1 + $0xc8] sm:$0xff]
      %v144 = vld [vmem:[%s1 + $0xd0] sm:$0xff]
      %v145 = vld [vmem:[%s1 + $0xd8] sm:$0xff]
      %v146 = vld [vmem:[%s1 + $0xe0] sm:$0xff]
      %v147 = vld [vmem:[%s1 + $0xe8] sm:$0xff]
      %v148 = vld [vmem:[%s1 + $0xf0] sm:$0xff]
      %v149 = vld [vmem:[%s1 + $0xf8] sm:$0xff]
      %v150 = vld [vmem:[%s1 + $0x100] sm:$0xff]
      %v151 = vld [vmem:[%s1 + $0x108] sm:$0xff]
      %v152 = vld [vmem:[%s1 + $0x110] sm:$0xff]
      %v153 = vld [vmem:[%s1 + $0x118] sm:$0xff]
      %v154 = vld [vmem:[%s1 + $0x120] sm:$0xff]
      %v155 = vld [vmem:[%s1 + $0x128] sm:$0xff]
      %v156 = vld [vmem:[%s1 + $0x130] sm:$0xff]
      %v157 = vld [vmem:[%s1 + $0x138] sm:$0xff]
      %v158 = vld [vmem:[%s1 + $0x140] sm:$0xff]
      %v159 = vld [vmem:[%s1 + $0x148] sm:$0xff]
      %v160 = vld [vmem:[%s1 + $0x150] sm:$0xff]
      %v161 = vld [vmem:[%s1 + $0x158] sm:$0xff]
      %v162 = vld [vmem:[%s1 + $0x160] sm:$0xff]
      %v163 = vld [vmem:[%s1 + $0x168] sm:$0xff]
      %v164 = vld [vmem:[%s1 + $0x170] sm:$0xff]
      %v165 = vld [vmem:[%s1 + $0x178] sm:$0xff]
      %v167 = vcombine.high %v117, %v117
      %v169 = vunpack.c.l.s4 1983009808
      %v170 = vunpack.c.0.s8 %v169
      %v171 = vlaneseq
      %v172 = vshrl.u32 %v171, 7
      %v173 = vsub.s32 %v170, %v172
      %v174 = vrot.slane %v117, %v173
      %v176 = vunpack.c.l.s4 1983009808
      %v177 = vunpack.c.0.s8 %v176
      %v178 = vlaneseq
      %v179 = vshrl.u32 %v178, 7
      %v180 = vsub.s32 %v177, %v179
      %v181 = vrot.slane %v167, %v180
      %v182 = vcombine.high %v174, %v174
      %186 = vmatprep.subr.mxu0 0.0
      %187 = vmatpush1.msra.mxu0 %v118
      %188 = vmatprep.subr.mxu0 0.0
      %189 = vmatpush1.msra.mxu0 %v119
      %190 = vmatprep.subr.mxu0 0.0
      %191 = vmatpush1.msra.mxu0 %v120
      %192 = vmatprep.subr.mxu0 0.0
      %193 = vmatpush1.msra.mxu0 %v121
      %194 = vmatprep.subr.mxu0 0.0
      %195 = vmatpush1.msra.mxu0 %v122
      %196 = vmatprep.subr.mxu0 0.0
      %197 = vmatpush1.msra.mxu0 %v123
      %198 = vmatprep.subr.mxu0 0.0
      %199 = vmatpush1.msra.mxu0 %v124
      %200 = vmatprep.subr.mxu0 0.0
      %201 = vmatpush1.msra.mxu0 %v125
      %202 = vmatprep.subr.mxu0 0.0
      %203 = vmatpush1.msra.mxu0 %v126
      %204 = vmatprep.subr.mxu0 0.0
      %205 = vmatpush1.msra.mxu0 %v127
      %206 = vmatprep.subr.mxu0 0.0
      %207 = vmatpush1.msra.mxu0 %v128
      %208 = vmatprep.subr.mxu0 0.0
      %209 = vmatpush1.msra.mxu0 %v129
      %210 = vmatprep.subr.mxu0 0.0
      %211 = vmatpush1.msra.mxu0 %v130
      %212 = vmatprep.subr.mxu0 0.0
      %213 = vmatpush1.msra.mxu0 %v131
      %214 = vmatprep.subr.mxu0 0.0
      %215 = vmatpush1.msra.mxu0 %v132
      %216 = vmatprep.subr.mxu0 0.0
      %217 = vmatpush1.msra.mxu0 %v133
      %218 = vmatprep.subr.mxu0 0.0
      %219 = vmatpush1.msra.mxu0 %v134
      %220 = vmatprep.subr.mxu0 0.0
      %221 = vmatpush1.msra.mxu0 %v135
      %222 = vmatprep.subr.mxu0 0.0
      %223 = vmatpush1.msra.mxu0 %v136
      %224 = vmatprep.subr.mxu0 0.0
      %225 = vmatpush1.msra.mxu0 %v137
      %226 = vmatprep.subr.mxu0 0.0
      %227 = vmatpush1.msra.mxu0 %v138
      %228 = vmatprep.subr.mxu0 0.0
      %229 = vmatpush1.msra.mxu0 %v139
      %230 = vmatprep.subr.mxu0 0.0
      %231 = vmatpush1.msra.mxu0 %v140
      %232 = vmatprep.subr.mxu0 0.0
      %233 = vmatpush1.msra.mxu0 %v141
      %234 = vmatprep.subr.mxu0 0.0
      %235 = vmatpush1.msra.mxu0 %v142
      %236 = vmatprep.subr.mxu0 0.0
      %237 = vmatpush1.msra.mxu0 %v143
      %238 = vmatprep.subr.mxu0 0.0
      %239 = vmatpush1.msra.mxu0 %v144
      %240 = vmatprep.subr.mxu0 0.0
      %241 = vmatpush1.msra.mxu0 %v145
      %242 = vmatprep.subr.mxu0 0.0
      %243 = vmatpush1.msra.mxu0 %v146
      %244 = vmatprep.subr.mxu0 0.0
      %245 = vmatpush1.msra.mxu0 %v147
      %246 = vmatprep.subr.mxu0 0.0
      %247 = vmatpush1.msra.mxu0 %v148
      %248 = vmatprep.subr.mxu0 0.0
      %249 = vmatpush1.msra.mxu0 %v149
      %250 = vmatprep.mubr.f32.mxu0 %v182
      %251 = vmatmul.mubr.f32.gmra.mrb[0].mxu0 %v174
      %v252 = vpop.f32.mrb[0].mxu0
      %v253 = vadd.f32 0.0, %v252
      %v254 = vpop.f32.mrb[0].mxu0
      %255 = vdwg.mxu0
      %256 = vmatprep.subr.mxu0 0.0
      %257 = vmatpush1.msra.mxu0 %v150
      %258 = vmatprep.subr.mxu0 0.0
      %259 = vmatpush1.msra.mxu0 %v151
      %260 = vmatprep.subr.mxu0 0.0
      %261 = vmatpush1.msra.mxu0 %v152
      %262 = vmatprep.subr.mxu0 0.0
      %263 = vmatpush1.msra.mxu0 %v153
      %264 = vmatprep.subr.mxu0 0.0
      %265 = vmatpush1.msra.mxu0 %v154
      %266 = vmatprep.subr.mxu0 0.0
      %267 = vmatpush1.msra.mxu0 %v155
      %268 = vmatprep.subr.mxu0 0.0
      %269 = vmatpush1.msra.mxu0 %v156
      %270 = vmatprep.subr.mxu0 0.0
      %271 = vmatpush1.msra.mxu0 %v157
      %272 = vmatprep.subr.mxu0 0.0
      %273 = vmatpush1.msra.mxu0 %v158
      %274 = vmatprep.subr.mxu0 0.0
      %275 = vmatpush1.msra.mxu0 %v159
      %276 = vmatprep.subr.mxu0 0.0
      %277 = vmatpush1.msra.mxu0 %v160
      %278 = vmatprep.subr.mxu0 0.0
      %279 = vmatpush1.msra.mxu0 %v161
      %280 = vmatprep.subr.mxu0 0.0
      %281 = vmatpush1.msra.mxu0 %v162
      %282 = vmatprep.subr.mxu0 0.0
      %283 = vmatpush1.msra.mxu0 %v163
      %284 = vmatprep.subr.mxu0 0.0
      %285 = vmatpush1.msra.mxu0 %v164
      %286 = vmatprep.subr.mxu0 0.0
      %287 = vmatpush1.msra.mxu0 %v165
      %288 = vmatprep.subr.mxu0 0.0
      %289 = vmatpush1.msra.mxu0 0.0
      %290 = vmatprep.subr.mxu0 0.0
      %291 = vmatpush1.msra.mxu0 0.0
      %292 = vmatprep.subr.mxu0 0.0
      %293 = vmatpush1.msra.mxu0 0.0
      %294 = vmatprep.subr.mxu0 0.0
      %295 = vmatpush1.msra.mxu0 0.0
      %296 = vmatprep.subr.mxu0 0.0
      %297 = vmatpush1.msra.mxu0 0.0
      %298 = vmatprep.subr.mxu0 0.0
      %299 = vmatpush1.msra.mxu0 0.0
      %300 = vmatprep.subr.mxu0 0.0
      %301 = vmatpush1.msra.mxu0 0.0
      %302 = vmatprep.subr.mxu0 0.0
      %303 = vmatpush1.msra.mxu0 0.0
      %304 = vmatprep.subr.mxu0 0.0
      %305 = vmatpush1.msra.mxu0 0.0
      %306 = vmatprep.subr.mxu0 0.0
      %307 = vmatpush1.msra.mxu0 0.0
      %308 = vmatprep.subr.mxu0 0.0
      %309 = vmatpush1.msra.mxu0 0.0
      %310 = vmatprep.subr.mxu0 0.0
      %311 = vmatpush1.msra.mxu0 0.0
      %312 = vmatprep.subr.mxu0 0.0
      %313 = vmatpush1.msra.mxu0 0.0
      %314 = vmatprep.subr.mxu0 0.0
      %315 = vmatpush1.msra.mxu0 0.0
      %316 = vmatprep.subr.mxu0 0.0
      %317 = vmatpush1.msra.mxu0 0.0
      %318 = vmatprep.subr.mxu0 0.0
      %319 = vmatpush1.msra.mxu0 0.0
      %320 = vmatprep.mubr.f32.mxu0 0.0
      %321 = vmatmul.mubr.f32.gmra.mrb[0].mxu0 %v181
      %v322 = vpop.f32.mrb[0].mxu0
      %v323 = vadd.f32 %v253, %v322
      %v324 = vpop.f32.mrb[0].mxu0
      %325 = vdwg.mxu0
      %326 = vst.msk [vmem:[#allocation5] sm:$0x3] %vm49, %v323
    $region17: #{prototype_embedding.1} parent=1 // pred_fallthru
      _
    // Predicated region
    $region18: #{prototype_embedding.1} parent=1 // pred_check
      _
    $region19: #{prototype_embedding.1} parent=1 // pred_check_branch
      %328 = sbr.rel (0) target = $region21
    $region20: #{prototype_embedding.1} parent=1 // pred_region
      %s330 = ssub.s32 32, 32
      %331 = vsyncadd [#allocation6], %s330
      %s333 = sshll.u32 [#allocation5], 4
      %s334 = int_to_ptr.vmem [resolvable:$true] %s333
      %336 = dma.vmem_to_hbm [thread:$0]  %s334, 32, %s2, [#allocation6]
    $region21: #{prototype_embedding.1} parent=1 // pred_fallthru
      _
    // Predicated region
    $region22: #{prototype_embedding.1} parent=1 // pred_check
      _
    $region23: #{prototype_embedding.1} parent=1 // pred_check_branch
      %338 = sbr.rel (0) target = $region25
    $region24: #{prototype_embedding.1} parent=1 // pred_region
      %339 = dma.done [#allocation6], 32
    $region25: #{prototype_embedding.1} parent=1 // pred_fallthru
      _
    %340 = vsyncpa [#allocation6], 1

</llo_original>
